<compile_context>
chip_gen: v6e
topology: v6e:2x2x1
jax: 0.10.0
libtpu: 0.0.40
codegen_flags: <defaults>
</compile_context>

<pallas_src>
import functools

import jax
import jax.numpy as jnp
from jax.experimental import pallas as pl
from jax.experimental.pallas import tpu as pltpu

LOG_STD_MAX = 2.0
LOG_STD_MIN = -20.0


def _round_up(x, m):
    return ((x + m - 1) // m) * m


def _choose_tile(B, batch_tile):
    """Pick a lane-axis (batch) tile.  Single full block for small B, else a
    multiple-of-128 tile with zero-padded batch."""
    if B <= batch_tile:
        return B, B
    tb = max(128, (batch_tile // 128) * 128)
    n_tiles = pl.cdiv(B, tb)
    return tb, n_tiles * tb


def _actor_kernel(*refs, n_net_layers, act_limit, act_dim, act_pad,
                  deterministic, with_logprob, mm_dtype):
    """One batch tile: MLP -> fused (mu|log_std) head -> rsample -> squash (+logp)."""
    n_out = 2 if with_logprob else 1
    in_refs, out_refs = refs[:-n_out], refs[-n_out:]
    pi_ref = out_refs[0]
    logp_ref = out_refs[1] if with_logprob else None

    i = 0
    obs_ref = in_refs[i]; i += 1
    if not deterministic:
        noise_ref = in_refs[i]; i += 1
    param_refs = in_refs[i:]

    # Hidden MLP: Linear -> ReLU (output_activation is ReLU too).  (features, TB).
    h = obs_ref[...]
    p = 0
    for _ in range(n_net_layers):
        w = param_refs[p][...]        # (out, in), mm_dtype
        b = param_refs[p + 1][...]    # (out, 1), f32
        p += 2
        h = jnp.maximum(
            jnp.dot(w, h.astype(mm_dtype), preferred_element_type=jnp.float32) + b,
            0.0,
        )

    # Fused head: one matmul producing [mu ; pad ; log_std ; pad] on sublanes.
    w_head = param_refs[p][...]       # (2*act_pad, hidden), mm_dtype
    b_head = param_refs[p + 1][...]   # (2*act_pad, 1), f32
    head = jnp.dot(w_head, h.astype(mm_dtype),
                   preferred_element_type=jnp.float32) + b_head

    mu = head[:act_dim, :]
    log_std = jnp.clip(head[act_pad:act_pad + act_dim, :], LOG_STD_MIN, LOG_STD_MAX)

    if deterministic:
        pi = mu
    else:
        std = jnp.exp(log_std)
        noise = noise_ref[...]
        pi = mu + std * noise         # rsample: mu + std * eps

    pi_ref[...] = (act_limit * jnp.tanh(pi)).astype(pi_ref.dtype)

    if with_logprob:
        # Normal log-prob with z = (pi - mu)/std == noise (exactly, by construction).
        if deterministic:
            gauss_term = -log_std - 0.5 * jnp.log(2.0 * jnp.pi)
        else:
            gauss_term = -0.5 * noise * noise - log_std - 0.5 * jnp.log(2.0 * jnp.pi)
        # tanh-squash correction: 2*(log 2 - pi - softplus(-2*pi)), stable softplus.
        x = -2.0 * pi
        softplus_x = jnp.maximum(x, 0.0) + jnp.log1p(jnp.exp(-jnp.abs(x)))
        corr_term = 2.0 * (jnp.log(2.0) - pi - softplus_x)
        # Single fused sublane reduction over the feature axis.
        logp_ref[...] = jnp.sum(gauss_term - corr_term, axis=0, keepdims=True)


def squashed_gaussian_actor_forward(obs, params, act_limit, noise=None,
                                    deterministic=False, with_logprob=True,
                                    batch_tile=512, matmul_dtype=jnp.bfloat16,
                                    vmem_limit_bytes=None):
    """
    obs:    (B, obs_dim) float32
    params: dict with PyTorch-layout tensors:
              'net':    list of (W (out,in), b (out,))
              'mu':     (W (act_dim,hidden), b (act_dim,))
              'logstd': (W (act_dim,hidden), b (act_dim,))
    noise:  (B, act_dim) standard-normal eps (required unless deterministic).
    Returns (pi_action (B, act_dim), log_p_pi (B,) or None).
    """
    B, obs_dim = obs.shape
    act_dim, hidden = params["mu"][0].shape
    act_pad = _round_up(act_dim, 8)
    n_net_layers = len(params["net"])

    if not deterministic and noise is None:
        raise ValueError("stochastic forward requires caller-supplied noise (eps)")

    # --- pack parameters (layout plumbing; in production this is done once) ---
    flat_params = []
    for w, b in params["net"]:
        flat_params.append(w.astype(matmul_dtype))
        flat_params.append(b.reshape(-1, 1).astype(jnp.float32))
    w_head = jnp.zeros((2 * act_pad, hidden), jnp.float32)
    w_head = w_head.at[:act_dim].set(params["mu"][0])
    w_head = w_head.at[act_pad:act_pad + act_dim].set(params["logstd"][0])
    b_head = jnp.zeros((2 * act_pad, 1), jnp.float32)
    b_head = b_head.at[:act_dim, 0].set(params["mu"][1])
    b_head = b_head.at[act_pad:act_pad + act_dim, 0].set(params["logstd"][1])
    flat_params.append(w_head.astype(matmul_dtype))
    flat_params.append(b_head)

    # --- batch tiling (batch on lanes) ---
    TB, B_pad = _choose_tile(B, batch_tile)
    obs_t = obs.T.astype(matmul_dtype)                      # (obs_dim, B)
    if B_pad != B:
        obs_t = jnp.pad(obs_t, ((0, 0), (0, B_pad - B)))
    inputs = [obs_t]
    in_specs = [pl.BlockSpec((obs_dim, TB), lambda i: (0, i))]

    if not deterministic:
        noise_t = noise.T.astype(jnp.float32)               # (act_dim, B)
        if B_pad != B:
            noise_t = jnp.pad(noise_t, ((0, 0), (0, B_pad - B)))
        inputs.append(noise_t)
        in_specs.append(pl.BlockSpec((act_dim, TB), lambda i: (0, i)))

    for p in flat_params:
        inputs.append(p)
        in_specs.append(pl.BlockSpec(p.shape, lambda i: (0, 0)))  # VMEM-resident

    pi_spec = pl.BlockSpec((act_dim, TB), lambda i: (0, i))
    pi_shape = jax.ShapeDtypeStruct((act_dim, B_pad), jnp.float32)
    if with_logprob:
        out_shape = (pi_shape, jax.ShapeDtypeStruct((1, B_pad), jnp.float32))
        out_specs = (pi_spec, pl.BlockSpec((1, TB), lambda i: (0, i)))
    else:
        out_shape = pi_shape
        out_specs = pi_spec

    kernel = functools.partial(
        _actor_kernel,
        n_net_layers=n_net_layers,
        act_limit=float(act_limit),
        act_dim=act_dim,
        act_pad=act_pad,
        deterministic=bool(deterministic),
        with_logprob=bool(with_logprob),
        mm_dtype=matmul_dtype,
    )

    cp_kwargs = dict(dimension_semantics=("parallel",))
    if vmem_limit_bytes is not None:
        cp_kwargs["vmem_limit_bytes"] = int(vmem_limit_bytes)

    result = pl.pallas_call(
        kernel,
        out_shape=out_shape,
        grid=(B_pad // TB,),
        in_specs=in_specs,
        out_specs=out_specs,
        compiler_params=pltpu.CompilerParams(**cp_kwargs),
    )(*inputs)

    if with_logprob:
        pi_t, logp = result
        log_p_pi = logp[0, :B]
    else:
        pi_t = result
        log_p_pi = None
    pi_action = pi_t[:, :B].T
    return pi_action, log_p_pi


# ----------------------------- reference & init ------------------------------

def _reference_forward(obs, params, act_limit, noise, deterministic, with_logprob):
    """Pure-JAX reference matching the PyTorch module."""
    h = obs
    for w, b in params["net"]:
        h = jax.nn.relu(h @ w.T + b)
    mu = h @ params["mu"][0].T + params["mu"][1]
    log_std = jnp.clip(h @ params["logstd"][0].T + params["logstd"][1],
                       LOG_STD_MIN, LOG_STD_MAX)
    std = jnp.exp(log_std)
    pi = mu if deterministic else mu + std * noise
    if with_logprob:
        logp = jnp.sum(-0.5 * ((pi - mu) / std) ** 2 - log_std
                       - 0.5 * jnp.log(2.0 * jnp.pi), axis=-1)
        logp = logp - jnp.sum(2.0 * (jnp.log(2.0) - pi - jax.nn.softplus(-2.0 * pi)),
                              axis=-1)
    else:
        logp = None
    return act_limit * jnp.tanh(pi), logp


def init_params(key, obs_dim, act_dim, hidden_sizes):
    """PyTorch-layout synthetic params: W (out, in), b (out,)."""
    params = {"net": []}
    sizes = (obs_dim, *hidden_sizes)
    for i in range(len(hidden_sizes)):
        key, kw, kb = jax.random.split(key, 3)
        w = 0.1 * jax.random.normal(kw, (sizes[i + 1], sizes[i]), dtype=jnp.float32)
        b = 0.01 * jax.random.normal(kb, (sizes[i + 1],), dtype=jnp.float32)
        params["net"].append((w, b))
    key, kw, kb = jax.random.split(key, 3)
    params["mu"] = (
        0.1 * jax.random.normal(kw, (act_dim, hidden_sizes[-1]), dtype=jnp.float32),
        0.01 * jax.random.normal(kb, (act_dim,), dtype=jnp.float32),
    )
    key, kw, kb = jax.random.split(key, 3)
    params["logstd"] = (
        0.1 * jax.random.normal(kw, (act_dim, hidden_sizes[-1]), dtype=jnp.float32),
        0.01 * jax.random.normal(kb, (act_dim,), dtype=jnp.float32),
    )
    return params


if __name__ == "__main__":
    key = jax.random.PRNGKey(0)

    B, obs_dim, act_dim = 8, 16, 8
    hidden_sizes = (32, 32)
    act_limit = 2.0

    key, k_obs, k_noise, k_params = jax.random.split(key, 4)
    obs = jax.random.normal(k_obs, (B, obs_dim), dtype=jnp.float32)
    noise = jax.random.normal(k_noise, (B, act_dim), dtype=jnp.float32)
    params = init_params(k_params, obs_dim, act_dim, hidden_sizes)

    # 1) stochastic + logprob, f32 matmuls — tight check vs pure-JAX reference.
    pi, logp = squashed_gaussian_actor_forward(
        obs, params, act_limit, noise=noise, deterministic=False,
        with_logprob=True, matmul_dtype=jnp.float32)
    jax.block_until_ready((pi, logp))
    pi_ref, logp_ref = _reference_forward(obs, params, act_limit, noise, False, True)
    assert pi.shape == (B, act_dim) and logp.shape == (B,)
    assert bool(jnp.all(jnp.isfinite(pi))) and bool(jnp.all(jnp.isfinite(logp)))
    assert bool(jnp.all(jnp.abs(pi) <= act_limit + 1e-5))
    assert bool(jnp.allclose(pi, pi_ref, atol=1e-3, rtol=1e-3))
    assert bool(jnp.allclose(logp, logp_ref, atol=1e-2, rtol=1e-3))

    # 2) deterministic, no logprob — noise input and logprob tail compiled out.
    pi_d, logp_d = squashed_gaussian_actor_forward(
        obs, params, act_limit, deterministic=True, with_logprob=False,
        matmul_dtype=jnp.float32)
    jax.block_until_ready(pi_d)
    pi_d_ref, _ = _reference_forward(obs, params, act_limit, None, True, False)
    assert logp_d is None
    assert bool(jnp.allclose(pi_d, pi_d_ref, atol=1e-3, rtol=1e-3))

    # 3) tiled + padded batch (grid=2, 200 -> 256 padded lanes) with bf16 matmuls.
    B2 = 200
    key, k_obs2, k_noise2 = jax.random.split(key, 3)
    obs2 = jax.random.normal(k_obs2, (B2, obs_dim), dtype=jnp.float32)
    noise2 = jax.random.normal(k_noise2, (B2, act_dim), dtype=jnp.float32)
    pi2, logp2 = squashed_gaussian_actor_forward(
        obs2, params, act_limit, noise=noise2, batch_tile=128,
        matmul_dtype=jnp.bfloat16)
    jax.block_until_ready((pi2, logp2))
    pi2_ref, logp2_ref = _reference_forward(obs2, params, act_limit, noise2, False, True)
    assert pi2.shape == (B2, act_dim) and logp2.shape == (B2,)
    assert bool(jnp.all(jnp.isfinite(pi2))) and bool(jnp.all(jnp.isfinite(logp2)))
    assert bool(jnp.all(jnp.abs(pi2) <= act_limit + 1e-5))
    assert bool(jnp.allclose(pi2, pi2_ref, atol=5e-2, rtol=5e-2))
    assert bool(jnp.allclose(logp2, logp2_ref, atol=0.5, rtol=5e-2))

    print("KERNEL_OK")
</pallas_src>

<mosaic_0001>
module attributes {stable_mosaic.version = 11 : i64} {
  func.func @_actor_kernel(%arg0: i32, %arg1: memref<16x8xf32, #tpu.memory_space<vmem>>, %arg2: memref<8x8xf32, #tpu.memory_space<vmem>>, %arg3: memref<32x16xf32, #tpu.memory_space<vmem>>, %arg4: memref<32x1xf32, #tpu.memory_space<vmem>>, %arg5: memref<32x32xf32, #tpu.memory_space<vmem>>, %arg6: memref<32x1xf32, #tpu.memory_space<vmem>>, %arg7: memref<16x32xf32, #tpu.memory_space<vmem>>, %arg8: memref<16x1xf32, #tpu.memory_space<vmem>>, %arg9: memref<8x8xf32, #tpu.memory_space<vmem>>, %arg10: memref<1x8xf32, #tpu.memory_space<vmem>>) attributes {dimension_semantics = [#tpu.dimension_semantics<parallel>], iteration_bounds = array<i64: 1>, scalar_prefetch = 0 : i64, scratch_operands = 0 : i64, tpu.core_type = #tpu.core_type<tc>, window_params = [{transform_indices = @transform_0, window_bounds = array<i64: 16, 8>}, {transform_indices = @transform_1, window_bounds = array<i64: 8, 8>}, {pipeline_mode = #tpu.pipeline_mode<synchronous>, transform_indices = @transform_2, window_bounds = array<i64: 32, 16>}, {pipeline_mode = #tpu.pipeline_mode<synchronous>, transform_indices = @transform_3, window_bounds = array<i64: 32, 1>}, {pipeline_mode = #tpu.pipeline_mode<synchronous>, transform_indices = @transform_4, window_bounds = array<i64: 32, 32>}, {pipeline_mode = #tpu.pipeline_mode<synchronous>, transform_indices = @transform_5, window_bounds = array<i64: 32, 1>}, {pipeline_mode = #tpu.pipeline_mode<synchronous>, transform_indices = @transform_6, window_bounds = array<i64: 16, 32>}, {pipeline_mode = #tpu.pipeline_mode<synchronous>, transform_indices = @transform_7, window_bounds = array<i64: 16, 1>}, {transform_indices = @transform_8, window_bounds = array<i64: 8, 8>}, {transform_indices = @transform_9, window_bounds = array<i64: 1, 8>}]} {
    %c0 = arith.constant 0 : index
    %c0_0 = arith.constant 0 : index
    %0 = vector.load %arg1[%c0, %c0_0] : memref<16x8xf32, #tpu.memory_space<vmem>>, vector<16x8xf32>
    %c0_1 = arith.constant 0 : index
    %c0_2 = arith.constant 0 : index
    %1 = vector.load %arg3[%c0_1, %c0_2] : memref<32x16xf32, #tpu.memory_space<vmem>>, vector<32x16xf32>
    %c0_3 = arith.constant 0 : index
    %c0_4 = arith.constant 0 : index
    %2 = vector.load %arg4[%c0_3, %c0_4] : memref<32x1xf32, #tpu.memory_space<vmem>>, vector<32x1xf32>
    %cst = arith.constant dense<0.000000e+00> : vector<32x8xf32>
    %3 = tpu.matmul %1, %0, %cst {dimension_numbers = #tpu.dot_dimension_numbers<[1], [0], [0], [1], [0, 0, 1, 1], [], []>} : vector<32x16xf32>, vector<16x8xf32>, vector<32x8xf32> -> vector<32x8xf32>
    %4 = vector.broadcast %2 : vector<32x1xf32> to vector<32x8xf32>
    %5 = arith.addf %3, %4 : vector<32x8xf32>
    %cst_5 = arith.constant 0.000000e+00 : f32
    %6 = vector.broadcast %cst_5 : f32 to vector<32x8xf32>
    %7 = arith.maximumf %5, %6 : vector<32x8xf32>
    %c0_6 = arith.constant 0 : index
    %c0_7 = arith.constant 0 : index
    %8 = vector.load %arg5[%c0_6, %c0_7] : memref<32x32xf32, #tpu.memory_space<vmem>>, vector<32x32xf32>
    %c0_8 = arith.constant 0 : index
    %c0_9 = arith.constant 0 : index
    %9 = vector.load %arg6[%c0_8, %c0_9] : memref<32x1xf32, #tpu.memory_space<vmem>>, vector<32x1xf32>
    %cst_10 = arith.constant dense<0.000000e+00> : vector<32x8xf32>
    %10 = tpu.matmul %8, %7, %cst_10 {dimension_numbers = #tpu.dot_dimension_numbers<[1], [0], [0], [1], [0, 0, 1, 1], [], []>} : vector<32x32xf32>, vector<32x8xf32>, vector<32x8xf32> -> vector<32x8xf32>
    %11 = vector.broadcast %9 : vector<32x1xf32> to vector<32x8xf32>
    %12 = arith.addf %10, %11 : vector<32x8xf32>
    %cst_11 = arith.constant 0.000000e+00 : f32
    %13 = vector.broadcast %cst_11 : f32 to vector<32x8xf32>
    %14 = arith.maximumf %12, %13 : vector<32x8xf32>
    %c0_12 = arith.constant 0 : index
    %c0_13 = arith.constant 0 : index
    %15 = vector.load %arg7[%c0_12, %c0_13] : memref<16x32xf32, #tpu.memory_space<vmem>>, vector<16x32xf32>
    %c0_14 = arith.constant 0 : index
    %c0_15 = arith.constant 0 : index
    %16 = vector.load %arg8[%c0_14, %c0_15] : memref<16x1xf32, #tpu.memory_space<vmem>>, vector<16x1xf32>
    %cst_16 = arith.constant dense<0.000000e+00> : vector<16x8xf32>
    %17 = tpu.matmul %15, %14, %cst_16 {dimension_numbers = #tpu.dot_dimension_numbers<[1], [0], [0], [1], [0, 0, 1, 1], [], []>} : vector<16x32xf32>, vector<32x8xf32>, vector<16x8xf32> -> vector<16x8xf32>
    %18 = vector.broadcast %16 : vector<16x1xf32> to vector<16x8xf32>
    %19 = arith.addf %17, %18 : vector<16x8xf32>
    %20 = vector.extract_strided_slice %19 {offsets = [0, 0], sizes = [8, 8], strides = [1, 1]} : vector<16x8xf32> to vector<8x8xf32>
    %21 = vector.extract_strided_slice %19 {offsets = [8, 0], sizes = [8, 8], strides = [1, 1]} : vector<16x8xf32> to vector<8x8xf32>
    %cst_17 = arith.constant -2.000000e+01 : f32
    %cst_18 = arith.constant 2.000000e+00 : f32
    %22 = vector.broadcast %cst_17 : f32 to vector<8x8xf32>
    %23 = arith.maximumf %22, %21 : vector<8x8xf32>
    %24 = vector.broadcast %cst_18 : f32 to vector<8x8xf32>
    %25 = arith.minimumf %24, %23 : vector<8x8xf32>
    %26 = math.exp %25 : vector<8x8xf32>
    %c0_19 = arith.constant 0 : index
    %c0_20 = arith.constant 0 : index
    %27 = vector.load %arg2[%c0_19, %c0_20] : memref<8x8xf32, #tpu.memory_space<vmem>>, vector<8x8xf32>
    %28 = arith.mulf %26, %27 : vector<8x8xf32>
    %29 = arith.addf %20, %28 : vector<8x8xf32>
    %30 = math.tanh %29 : vector<8x8xf32>
    %cst_21 = arith.constant 2.000000e+00 : f32
    %31 = vector.broadcast %cst_21 : f32 to vector<8x8xf32>
    %32 = arith.mulf %31, %30 : vector<8x8xf32>
    %c0_22 = arith.constant 0 : index
    %c0_23 = arith.constant 0 : index
    %33 = vector.load %arg9[%c0_22, %c0_23] : memref<8x8xf32, #tpu.memory_space<vmem>>, vector<8x8xf32>
    tpu.vector_store %arg9[%c0_22, %c0_23], %32 {strides = array<i32>} : memref<8x8xf32, #tpu.memory_space<vmem>>, vector<8x8xf32>,
    %cst_24 = arith.constant -5.000000e-01 : f32
    %34 = vector.broadcast %cst_24 : f32 to vector<8x8xf32>
    %35 = arith.mulf %34, %27 : vector<8x8xf32>
    %36 = arith.mulf %35, %27 : vector<8x8xf32>
    %37 = arith.subf %36, %25 : vector<8x8xf32>
    %cst_25 = arith.constant 6.28318548 : f32
    %38 = math.log %cst_25 : f32
    %cst_26 = arith.constant 5.000000e-01 : f32
    %39 = arith.mulf %cst_26, %38 : f32
    %40 = vector.broadcast %39 : f32 to vector<8x8xf32>
    %41 = arith.subf %37, %40 : vector<8x8xf32>
    %cst_27 = arith.constant -2.000000e+00 : f32
    %42 = vector.broadcast %cst_27 : f32 to vector<8x8xf32>
    %43 = arith.mulf %42, %29 : vector<8x8xf32>
    %cst_28 = arith.constant 0.000000e+00 : f32
    %44 = vector.broadcast %cst_28 : f32 to vector<8x8xf32>
    %45 = arith.maximumf %43, %44 : vector<8x8xf32>
    %46 = math.absf %43 : vector<8x8xf32>
    %cst_29 = arith.constant 0.000000e+00 : f32
    %47 = vector.broadcast %cst_29 : f32 to vector<8x8xf32>
    %48 = arith.subf %47, %46 : vector<8x8xf32>
    %49 = math.exp %48 : vector<8x8xf32>
    %50 = math.log1p %49 : vector<8x8xf32>
    %51 = arith.addf %45, %50 : vector<8x8xf32>
    %cst_30 = arith.constant 2.000000e+00 : f32
    %52 = math.log %cst_30 : f32
    %53 = vector.broadcast %52 : f32 to vector<8x8xf32>
    %54 = arith.subf %53, %29 : vector<8x8xf32>
    %55 = arith.subf %54, %51 : vector<8x8xf32>
    %cst_31 = arith.constant 2.000000e+00 : f32
    %56 = vector.broadcast %cst_31 : f32 to vector<8x8xf32>
    %57 = arith.mulf %56, %55 : vector<8x8xf32>
    %58 = arith.subf %41, %57 : vector<8x8xf32>
    %cst_32 = arith.constant dense<0.000000e+00> : vector<8xf32>
    %59 = vector.multi_reduction <add>, %58, %cst_32 [0] : vector<8x8xf32> to vector<8xf32>
    %60 = vector.shape_cast %59 : vector<8xf32> to vector<1x8xf32>
    %c0_33 = arith.constant 0 : index
    %c0_34 = arith.constant 0 : index
    %61 = vector.load %arg10[%c0_33, %c0_34] : memref<1x8xf32, #tpu.memory_space<vmem>>, vector<1x8xf32>
    tpu.vector_store %arg10[%c0_33, %c0_34], %60 {strides = array<i32>} : memref<1x8xf32, #tpu.memory_space<vmem>>, vector<1x8xf32>,
    return
  }
  func.func @transform_0(%arg0: i32) -> (i32, i32) {
    %c0_i32 = arith.constant 0 : i32
    %c0_i32_0 = arith.constant 0 : i32
    return %c0_i32, %arg0 : i32, i32
  }
  func.func @transform_1(%arg0: i32) -> (i32, i32) {
    %c0_i32 = arith.constant 0 : i32
    %c0_i32_0 = arith.constant 0 : i32
    return %c0_i32, %arg0 : i32, i32
  }
  func.func @transform_2(%arg0: i32) -> (i32, i32) {
    %c0_i32 = arith.constant 0 : i32
    %c0_i32_0 = arith.constant 0 : i32
    %c0_i32_1 = arith.constant 0 : i32
    return %c0_i32, %c0_i32_0 : i32, i32
  }
  func.func @transform_3(%arg0: i32) -> (i32, i32) {
    %c0_i32 = arith.constant 0 : i32
    %c0_i32_0 = arith.constant 0 : i32
    %c0_i32_1 = arith.constant 0 : i32
    return %c0_i32, %c0_i32_0 : i32, i32
  }
  func.func @transform_4(%arg0: i32) -> (i32, i32) {
    %c0_i32 = arith.constant 0 : i32
    %c0_i32_0 = arith.constant 0 : i32
    %c0_i32_1 = arith.constant 0 : i32
    return %c0_i32, %c0_i32_0 : i32, i32
  }
  func.func @transform_5(%arg0: i32) -> (i32, i32) {
    %c0_i32 = arith.constant 0 : i32
    %c0_i32_0 = arith.constant 0 : i32
    %c0_i32_1 = arith.constant 0 : i32
    return %c0_i32, %c0_i32_0 : i32, i32
  }
  func.func @transform_6(%arg0: i32) -> (i32, i32) {
    %c0_i32 = arith.constant 0 : i32
    %c0_i32_0 = arith.constant 0 : i32
    %c0_i32_1 = arith.constant 0 : i32
    return %c0_i32, %c0_i32_0 : i32, i32
  }
  func.func @transform_7(%arg0: i32) -> (i32, i32) {
    %c0_i32 = arith.constant 0 : i32
    %c0_i32_0 = arith.constant 0 : i32
    %c0_i32_1 = arith.constant 0 : i32
    return %c0_i32, %c0_i32_0 : i32, i32
  }
  func.func @transform_8(%arg0: i32) -> (i32, i32) {
    %c0_i32 = arith.constant 0 : i32
    %c0_i32_0 = arith.constant 0 : i32
    return %c0_i32, %arg0 : i32, i32
  }
  func.func @transform_9(%arg0: i32) -> (i32, i32) {
    %c0_i32 = arith.constant 0 : i32
    %c0_i32_0 = arith.constant 0 : i32
    return %c0_i32, %arg0 : i32, i32
  }
}

</mosaic_0001>

<llo_original>
// kernel: tpu_custom_call.1
$region0: #{tpu_custom_call.1}
  #allocation0 [shape = 'u32[]', space=smem, size = 0x4, offset = 0x4, fixed_abs, tag = 'smem constant byte address 0x4 - core index']
  #allocation1 [shape = 'u32[144,128]{1,0:T(1,128)}', space=vmem, size = 0x12000, scoped, tag = 'internal scratch']
  %s0 = inlined_call_operand.vmem [shape: f32[16,8], index: 0, kind: input, shape index: {}]
  %s1 = inlined_call_operand.vmem [shape: f32[8,8], index: 1, kind: input, shape index: {}]
  %s2 = inlined_call_operand.vmem [shape: f32[32,16], index: 2, kind: input, shape index: {}]
  %s3 = inlined_call_operand.vmem [shape: f32[32,1], index: 3, kind: input, shape index: {}]
  %s4 = inlined_call_operand.vmem [shape: f32[32,32], index: 4, kind: input, shape index: {}]
  %s5 = inlined_call_operand.vmem [shape: f32[32,1], index: 5, kind: input, shape index: {}]
  %s6 = inlined_call_operand.vmem [shape: f32[16,32], index: 6, kind: input, shape index: {}]
  %s7 = inlined_call_operand.vmem [shape: f32[16,1], index: 7, kind: input, shape index: {}]
  %s8 = inlined_call_operand.hbm [shape: f32[8,8], index: 8, kind: output, shape index: {0}]
  %s9 = inlined_call_operand.hbm [shape: f32[1,8], index: 9, kind: output, shape index: {1}]
  %10 = xla_tuple %s8, %s9
  %s11 = sld [smem:[#allocation0]]
  $region50: #{tpu_custom_call.1} parent=0
    _
  %s13 = ssub.s32 1, %s11
  %s14 = scalar_select 0, %s13, %s11
  $region1: #{tpu_custom_call.1} parent=0
    #allocation2 [shape = 'u8[4096]{0}', space=vmem, size = 0x1000, scoped, tag = 'output window, operand 0, single buffered']
    #allocation3 [shape = 's32[1]{0}', space=sflag, size = 0x4, scoped, tag = 'scoped memory for tpu_custom_call.1']
    #allocation4 [shape = 'u8[512]{0}', space=vmem, size = 0x400, scoped, tag = 'output window, operand 1, single buffered']
    #allocation5 [shape = 's32[1]{0}', space=sflag, size = 0x4, scoped, tag = 'scoped memory for tpu_custom_call.1']
    %15 = vsyncpa [#allocation3], 0
    %16 = vsyncpa [#allocation5], 0
    // Predicated region
    $region2: #{tpu_custom_call.1} parent=1 // pred_check
      _
    $region3: #{tpu_custom_call.1} parent=1 // pred_check_branch
      %18 = sbr.rel (0) target = $region5
    $region4: #{tpu_custom_call.1} parent=1 // pred_region
      _
    $region5: #{tpu_custom_call.1} parent=1 // pred_fallthru
      _
    // Predicated region
    $region6: #{tpu_custom_call.1} parent=1 // pred_check
      _
    $region7: #{tpu_custom_call.1} parent=1 // pred_check_branch
      %20 = sbr.rel (0) target = $region9
    $region8: #{tpu_custom_call.1} parent=1 // pred_region
      _
    $region9: #{tpu_custom_call.1} parent=1 // pred_fallthru
      _
    // Predicated region
    $region10: #{tpu_custom_call.1} parent=1 // pred_check
      _
    $region11: #{tpu_custom_call.1} parent=1 // pred_check_branch
      %22 = sbr.rel (0) target = $region13
    $region12: #{tpu_custom_call.1} parent=1 // pred_region
      _
    $region13: #{tpu_custom_call.1} parent=1 // pred_fallthru
      _
    // Predicated region
    $region14: #{tpu_custom_call.1} parent=1 // pred_check
      _
    $region15: #{tpu_custom_call.1} parent=1 // pred_check_branch
      %24 = sbr.rel (0) target = $region17
    $region16: #{tpu_custom_call.1} parent=1 // pred_region
      _
    $region17: #{tpu_custom_call.1} parent=1 // pred_fallthru
      _
    // Predicated region
    $region18: #{tpu_custom_call.1} parent=1 // pred_check
      _
    $region19: #{tpu_custom_call.1} parent=1 // pred_check_branch
      %26 = sbr.rel (0) target = $region21
    $region20: #{tpu_custom_call.1} parent=1 // pred_region
      _
    $region21: #{tpu_custom_call.1} parent=1 // pred_fallthru
      _
    // Predicated region
    $region22: #{tpu_custom_call.1} parent=1 // pred_check
      _
    $region23: #{tpu_custom_call.1} parent=1 // pred_check_branch
      %28 = sbr.rel (0) target = $region25
    $region24: #{tpu_custom_call.1} parent=1 // pred_region
      _
    $region25: #{tpu_custom_call.1} parent=1 // pred_fallthru
      _
    // Predicated region
    $region26: #{tpu_custom_call.1} parent=1 // pred_check
      _
    $region27: #{tpu_custom_call.1} parent=1 // pred_check_branch
      %30 = sbr.rel (0) target = $region29
    $region28: #{tpu_custom_call.1} parent=1 // pred_region
      _
    $region29: #{tpu_custom_call.1} parent=1 // pred_fallthru
      _
    // Predicated region
    $region30: #{tpu_custom_call.1} parent=1 // pred_check
      _
    $region31: #{tpu_custom_call.1} parent=1 // pred_check_branch
      %32 = sbr.rel (0) target = $region33
    $region32: #{tpu_custom_call.1} parent=1 // pred_region
      _
    $region33: #{tpu_custom_call.1} parent=1 // pred_fallthru
      _
    %v33 = vld [vmem:[%s0] sm:$0xff]
    %v34 = vld [vmem:[%s0 + $0x8] sm:$0xff]
    %v35 = vld [vmem:[%s2] sm:$0xff]
    %v36 = vld [vmem:[%s2 + $0x8] sm:$0xff]
    %v37 = vld [vmem:[%s2 + $0x10] sm:$0xff]
    %v38 = vld [vmem:[%s2 + $0x18] sm:$0xff]
    %v39 = vld [vmem:[%s3] sm:$0xff]
    %v40 = vld [vmem:[%s3 + $0x8] sm:$0xff]
    %v41 = vld [vmem:[%s3 + $0x10] sm:$0xff]
    %v42 = vld [vmem:[%s3 + $0x18] sm:$0xff]
    %44 = vset.pattern.permute.xlu0 0
    %45 = vperm.xlu0 %44, %v39
    %v46 = vpop.permute.xlu0 %45
    %49 = vset.pattern.permute.xlu0 0
    %50 = vperm.xlu0 %49, %v40
    %v51 = vpop.permute.xlu0 %50
    %54 = vset.pattern.permute.xlu0 0
    %55 = vperm.xlu0 %54, %v41
    %v56 = vpop.permute.xlu0 %55
    %59 = vset.pattern.permute.xlu0 0
    %60 = vperm.xlu0 %59, %v42
    %v61 = vpop.permute.xlu0 %60
    %vm63 = vcmask 130048
    %v65 = vsel %vm63, %v35, 0
    %v68 = vsel %vm63, %v36, 0
    %v71 = vsel %vm63, %v37, 0
    %v74 = vsel %vm63, %v38, 0
    %76 = vmatprep.subr.mxu0 0.0
    %77 = vmatpush1.msra.mxu0 0.0
    %78 = vmatprep.subr.mxu0 0.0
    %79 = vmatpush1.msra.mxu0 0.0
    %80 = vmatprep.subr.mxu0 0.0
    %81 = vmatpush1.msra.mxu0 0.0
    %82 = vmatprep.subr.mxu0 0.0
    %83 = vmatpush1.msra.mxu0 0.0
    %84 = vmatprep.subr.mxu0 0.0
    %85 = vmatpush1.msra.mxu0 0.0
    %86 = vmatprep.subr.mxu0 0.0
    %87 = vmatpush1.msra.mxu0 0.0
    %88 = vmatprep.subr.mxu0 0.0
    %89 = vmatpush1.msra.mxu0 0.0
    %90 = vmatprep.subr.mxu0 0.0
    %91 = vmatpush1.msra.mxu0 0.0
    %92 = vmatprep.subr.mxu0 0.0
    %93 = vmatpush1.msra.mxu0 0.0
    %94 = vmatprep.subr.mxu0 0.0
    %95 = vmatpush1.msra.mxu0 0.0
    %96 = vmatprep.subr.mxu0 0.0
    %97 = vmatpush1.msra.mxu0 0.0
    %98 = vmatprep.subr.mxu0 0.0
    %99 = vmatpush1.msra.mxu0 0.0
    %100 = vmatprep.subr.mxu0 0.0
    %101 = vmatpush1.msra.mxu0 0.0
    %102 = vmatprep.subr.mxu0 0.0
    %103 = vmatpush1.msra.mxu0 0.0
    %104 = vmatprep.subr.mxu0 0.0
    %105 = vmatpush1.msra.mxu0 %v34
    %106 = vmatprep.subr.mxu0 0.0
    %107 = vmatpush1.msra.mxu0 %v33
    %108 = vmatprep.subr.mxu0 0.0
    %109 = vmatpush2.msra.mxu0 0.0
    %110 = vmatprep.subr.mxu0 0.0
    %111 = vmatpush2.msra.mxu0 0.0
    %112 = vmatprep.subr.mxu0 0.0
    %113 = vmatpush2.msra.mxu0 0.0
    %114 = vmatprep.subr.mxu0 0.0
    %115 = vmatpush2.msra.mxu0 0.0
    %116 = vmatprep.subr.mxu0 0.0
    %117 = vmatpush2.msra.mxu0 0.0
    %118 = vmatprep.subr.mxu0 0.0
    %119 = vmatpush2.msra.mxu0 0.0
    %120 = vmatprep.subr.mxu0 0.0
    %121 = vmatpush2.msra.mxu0 0.0
    %122 = vmatprep.subr.mxu0 0.0
    %123 = vmatpush2.msra.mxu0 0.0
    %124 = vmatprep.subr.mxu0 0.0
    %125 = vmatpush2.msra.mxu0 0.0
    %126 = vmatprep.subr.mxu0 0.0
    %127 = vmatpush2.msra.mxu0 0.0
    %128 = vmatprep.subr.mxu0 0.0
    %129 = vmatpush2.msra.mxu0 0.0
    %130 = vmatprep.subr.mxu0 0.0
    %131 = vmatpush2.msra.mxu0 0.0
    %132 = vmatprep.subr.mxu0 0.0
    %133 = vmatpush2.msra.mxu0 0.0
    %134 = vmatprep.subr.mxu0 0.0
    %135 = vmatpush2.msra.mxu0 0.0
    %136 = vmatprep.subr.mxu0 0.0
    %137 = vmatpush2.msra.mxu0 0.0
    %138 = vmatprep.subr.mxu0 0.0
    %139 = vmatpush2.msra.mxu0 0.0
    %140 = vmatprep.mubr.f32.mxu0 0.0
    %141 = vmatmul.mubr.f32.gmra.mxu0 %v65
    %v142 = vpop.f32.mrf.mxu0
    %v143 = vadd.f32 %v46, %v142
    %v144 = vpop.f32.mrf.mxu0
    %145 = vmatprep.mubr.f32.mxu0 0.0
    %146 = vmatmul.mubr.f32.gmra.mxu0 %v68
    %v147 = vpop.f32.mrf.mxu0
    %v148 = vadd.f32 %v51, %v147
    %v149 = vpop.f32.mrf.mxu0
    %150 = vmatprep.mubr.f32.mxu0 0.0
    %151 = vmatmul.mubr.f32.gmra.mxu0 %v71
    %v152 = vpop.f32.mrf.mxu0
    %v153 = vadd.f32 %v56, %v152
    %v154 = vpop.f32.mrf.mxu0
    %155 = vmatprep.mubr.f32.mxu0 0.0
    %156 = vmatmul.mubr.f32.gmra.mxu0 %v74
    %v157 = vpop.f32.mrf.mxu0
    %v158 = vadd.f32 %v61, %v157
    %v159 = vpop.f32.mrf.mxu0
    %160 = vdwg.mxu0
    %v161 = vmax.f32 %v143, 0.0
    %v162 = vmax.f32 %v148, 0.0
    %v163 = vmax.f32 %v153, 0.0
    %v164 = vmax.f32 %v158, 0.0
    %v165 = vld [vmem:[%s4] sm:$0xff]
    %v166 = vld [vmem:[%s4 + $0x8] sm:$0xff]
    %v167 = vld [vmem:[%s4 + $0x10] sm:$0xff]
    %v168 = vld [vmem:[%s4 + $0x18] sm:$0xff]
    %v169 = vld [vmem:[%s5] sm:$0xff]
    %v170 = vld [vmem:[%s5 + $0x8] sm:$0xff]
    %v171 = vld [vmem:[%s5 + $0x10] sm:$0xff]
    %v172 = vld [vmem:[%s5 + $0x18] sm:$0xff]
    %174 = vset.pattern.permute.xlu0 0
    %175 = vperm.xlu0 %174, %v169
    %v176 = vpop.permute.xlu0 %175
    %179 = vset.pattern.permute.xlu0 0
    %180 = vperm.xlu0 %179, %v170
    %v181 = vpop.permute.xlu0 %180
    %184 = vset.pattern.permute.xlu0 0
    %185 = vperm.xlu0 %184, %v171
    %v186 = vpop.permute.xlu0 %185
    %189 = vset.pattern.permute.xlu0 0
    %190 = vperm.xlu0 %189, %v172
    %v191 = vpop.permute.xlu0 %190
    %vm193 = vcmask 261120
    %v195 = vsel %vm193, %v165, 0
    %v198 = vsel %vm193, %v166, 0
    %v201 = vsel %vm193, %v167, 0
    %v204 = vsel %vm193, %v168, 0
    %206 = vmatprep.subr.mxu0 0.0
    %207 = vmatpush1.msra.mxu0 0.0
    %208 = vmatprep.subr.mxu0 0.0
    %209 = vmatpush1.msra.mxu0 0.0
    %210 = vmatprep.subr.mxu0 0.0
    %211 = vmatpush1.msra.mxu0 0.0
    %212 = vmatprep.subr.mxu0 0.0
    %213 = vmatpush1.msra.mxu0 0.0
    %214 = vmatprep.subr.mxu0 0.0
    %215 = vmatpush1.msra.mxu0 0.0
    %216 = vmatprep.subr.mxu0 0.0
    %217 = vmatpush1.msra.mxu0 0.0
    %218 = vmatprep.subr.mxu0 0.0
    %219 = vmatpush1.msra.mxu0 0.0
    %220 = vmatprep.subr.mxu0 0.0
    %221 = vmatpush1.msra.mxu0 0.0
    %222 = vmatprep.subr.mxu0 0.0
    %223 = vmatpush1.msra.mxu0 0.0
    %224 = vmatprep.subr.mxu0 0.0
    %225 = vmatpush1.msra.mxu0 0.0
    %226 = vmatprep.subr.mxu0 0.0
    %227 = vmatpush1.msra.mxu0 0.0
    %228 = vmatprep.subr.mxu0 0.0
    %229 = vmatpush1.msra.mxu0 0.0
    %230 = vmatprep.subr.mxu0 0.0
    %231 = vmatpush1.msra.mxu0 %v164
    %232 = vmatprep.subr.mxu0 0.0
    %233 = vmatpush1.msra.mxu0 %v163
    %234 = vmatprep.subr.mxu0 0.0
    %235 = vmatpush1.msra.mxu0 %v162
    %236 = vmatprep.subr.mxu0 0.0
    %237 = vmatpush1.msra.mxu0 %v161
    %238 = vmatprep.subr.mxu0 0.0
    %239 = vmatpush2.msra.mxu0 0.0
    %240 = vmatprep.subr.mxu0 0.0
    %241 = vmatpush2.msra.mxu0 0.0
    %242 = vmatprep.subr.mxu0 0.0
    %243 = vmatpush2.msra.mxu0 0.0
    %244 = vmatprep.subr.mxu0 0.0
    %245 = vmatpush2.msra.mxu0 0.0
    %246 = vmatprep.subr.mxu0 0.0
    %247 = vmatpush2.msra.mxu0 0.0
    %248 = vmatprep.subr.mxu0 0.0
    %249 = vmatpush2.msra.mxu0 0.0
    %250 = vmatprep.subr.mxu0 0.0
    %251 = vmatpush2.msra.mxu0 0.0
    %252 = vmatprep.subr.mxu0 0.0
    %253 = vmatpush2.msra.mxu0 0.0
    %254 = vmatprep.subr.mxu0 0.0
    %255 = vmatpush2.msra.mxu0 0.0
    %256 = vmatprep.subr.mxu0 0.0
    %257 = vmatpush2.msra.mxu0 0.0
    %258 = vmatprep.subr.mxu0 0.0
    %259 = vmatpush2.msra.mxu0 0.0
    %260 = vmatprep.subr.mxu0 0.0
    %261 = vmatpush2.msra.mxu0 0.0
    %262 = vmatprep.subr.mxu0 0.0
    %263 = vmatpush2.msra.mxu0 0.0
    %264 = vmatprep.subr.mxu0 0.0
    %265 = vmatpush2.msra.mxu0 0.0
    %266 = vmatprep.subr.mxu0 0.0
    %267 = vmatpush2.msra.mxu0 0.0
    %268 = vmatprep.subr.mxu0 0.0
    %269 = vmatpush2.msra.mxu0 0.0
    %270 = vmatprep.mubr.f32.mxu0 0.0
    %271 = vmatmul.mubr.f32.gmra.mxu0 %v195
    %v272 = vpop.f32.mrf.mxu0
    %v273 = vadd.f32 %v176, %v272
    %v274 = vpop.f32.mrf.mxu0
    %275 = vmatprep.mubr.f32.mxu0 0.0
    %276 = vmatmul.mubr.f32.gmra.mxu0 %v198
    %v277 = vpop.f32.mrf.mxu0
    %v278 = vadd.f32 %v181, %v277
    %v279 = vpop.f32.mrf.mxu0
    %280 = vmatprep.mubr.f32.mxu0 0.0
    %281 = vmatmul.mubr.f32.gmra.mxu0 %v201
    %v282 = vpop.f32.mrf.mxu0
    %v283 = vadd.f32 %v186, %v282
    %v284 = vpop.f32.mrf.mxu0
    %285 = vmatprep.mubr.f32.mxu0 0.0
    %286 = vmatmul.mubr.f32.gmra.mxu0 %v204
    %v287 = vpop.f32.mrf.mxu0
    %v288 = vadd.f32 %v191, %v287
    %v289 = vpop.f32.mrf.mxu0
    %290 = vdwg.mxu0
    %v291 = vmax.f32 %v273, 0.0
    %v292 = vmax.f32 %v278, 0.0
    %v293 = vmax.f32 %v283, 0.0
    %v294 = vmax.f32 %v288, 0.0
    %v295 = vld [vmem:[%s6] sm:$0xff]
    %v296 = vld [vmem:[%s6 + $0x8] sm:$0xff]
    %v297 = vld [vmem:[%s7] sm:$0xff]
    %v298 = vld [vmem:[%s7 + $0x8] sm:$0xff]
    %300 = vset.pattern.permute.xlu0 0
    %301 = vperm.xlu0 %300, %v297
    %v302 = vpop.permute.xlu0 %301
    %305 = vset.pattern.permute.xlu0 0
    %306 = vperm.xlu0 %305, %v298
    %v307 = vpop.permute.xlu0 %306
    %v310 = vsel %vm193, %v295, 0
    %v313 = vsel %vm193, %v296, 0
    %315 = vmatprep.subr.mxu0 0.0
    %316 = vmatpush1.msra.mxu0 0.0
    %317 = vmatprep.subr.mxu0 0.0
    %318 = vmatpush1.msra.mxu0 0.0
    %319 = vmatprep.subr.mxu0 0.0
    %320 = vmatpush1.msra.mxu0 0.0
    %321 = vmatprep.subr.mxu0 0.0
    %322 = vmatpush1.msra.mxu0 0.0
    %323 = vmatprep.subr.mxu0 0.0
    %324 = vmatpush1.msra.mxu0 0.0
    %325 = vmatprep.subr.mxu0 0.0
    %326 = vmatpush1.msra.mxu0 0.0
    %327 = vmatprep.subr.mxu0 0.0
    %328 = vmatpush1.msra.mxu0 0.0
    %329 = vmatprep.subr.mxu0 0.0
    %330 = vmatpush1.msra.mxu0 0.0
    %331 = vmatprep.subr.mxu0 0.0
    %332 = vmatpush1.msra.mxu0 0.0
    %333 = vmatprep.subr.mxu0 0.0
    %334 = vmatpush1.msra.mxu0 0.0
    %335 = vmatprep.subr.mxu0 0.0
    %336 = vmatpush1.msra.mxu0 0.0
    %337 = vmatprep.subr.mxu0 0.0
    %338 = vmatpush1.msra.mxu0 0.0
    %339 = vmatprep.subr.mxu0 0.0
    %340 = vmatpush1.msra.mxu0 %v294
    %341 = vmatprep.subr.mxu0 0.0
    %342 = vmatpush1.msra.mxu0 %v293
    %343 = vmatprep.subr.mxu0 0.0
    %344 = vmatpush1.msra.mxu0 %v292
    %345 = vmatprep.subr.mxu0 0.0
    %346 = vmatpush1.msra.mxu0 %v291
    %347 = vmatprep.subr.mxu0 0.0
    %348 = vmatpush2.msra.mxu0 0.0
    %349 = vmatprep.subr.mxu0 0.0
    %350 = vmatpush2.msra.mxu0 0.0
    %351 = vmatprep.subr.mxu0 0.0
    %352 = vmatpush2.msra.mxu0 0.0
    %353 = vmatprep.subr.mxu0 0.0
    %354 = vmatpush2.msra.mxu0 0.0
    %355 = vmatprep.subr.mxu0 0.0
    %356 = vmatpush2.msra.mxu0 0.0
    %357 = vmatprep.subr.mxu0 0.0
    %358 = vmatpush2.msra.mxu0 0.0
    %359 = vmatprep.subr.mxu0 0.0
    %360 = vmatpush2.msra.mxu0 0.0
    %361 = vmatprep.subr.mxu0 0.0
    %362 = vmatpush2.msra.mxu0 0.0
    %363 = vmatprep.subr.mxu0 0.0
    %364 = vmatpush2.msra.mxu0 0.0
    %365 = vmatprep.subr.mxu0 0.0
    %366 = vmatpush2.msra.mxu0 0.0
    %367 = vmatprep.subr.mxu0 0.0
    %368 = vmatpush2.msra.mxu0 0.0
    %369 = vmatprep.subr.mxu0 0.0
    %370 = vmatpush2.msra.mxu0 0.0
    %371 = vmatprep.subr.mxu0 0.0
    %372 = vmatpush2.msra.mxu0 0.0
    %373 = vmatprep.subr.mxu0 0.0
    %374 = vmatpush2.msra.mxu0 0.0
    %375 = vmatprep.subr.mxu0 0.0
    %376 = vmatpush2.msra.mxu0 0.0
    %377 = vmatprep.subr.mxu0 0.0
    %378 = vmatpush2.msra.mxu0 0.0
    %379 = vmatprep.mubr.f32.mxu0 0.0
    %380 = vmatmul.mubr.f32.gmra.mxu0 %v310
    %v381 = vpop.f32.mrf.mxu0
    %v382 = vadd.f32 %v302, %v381
    %v383 = vpop.f32.mrf.mxu0
    %384 = vmatprep.mubr.f32.mxu0 0.0
    %385 = vmatmul.mubr.f32.gmra.mxu0 %v313
    %v386 = vpop.f32.mrf.mxu0
    %v387 = vadd.f32 %v307, %v386
    %v388 = vpop.f32.mrf.mxu0
    %389 = vdwg.mxu0
    %v390 = vmax.f32 %v387, -20.0
    %v391 = vmin.f32 %v390, 2.0
    %v392 = vmul.f32 %v391, 1.442695
    %v393 = vpow.pop %v392
    %v394 = vld [vmem:[%s1] sm:$0xff]
    %v395 = vmul.f32 %v393, %v394
    %v396 = vadd.f32 %v382, %v395
    %v397 = vtanh.pop %v396
    %v398 = vmul.f32 %v397, 2.0
    %vm399 = vcmask 64512
    %400 = vst.msk [vmem:[#allocation2] sm:$0xff] %vm399, %v398
    %v401 = vmul.f32 %v394, -0.5
    %v402 = vmul.f32 %v401, %v394
    %v403 = vsub.f32 %v402, %v391
    %v404 = vsub.f32 %v403, 0.9189385
    %v405 = vmul.f32 %v396, -2.0
    %v406 = vmax.f32 %v405, 0.0
    %v407 = vand.u32 2147483647, %v405
    %v408 = vsub.f32 0.0, %v407
    %v409 = vmul.f32 %v408, 1.442695
    %v410 = vpow.pop %v409
    %v411 = vadd.f32 %v410, 1.0
    %v412 = vlog2.pop %v411
    %v413 = vmul.f32 %v412, 0.6931472
    %v414 = vmul.f32 -0.5, %v410
    %v415 = vadd.f32 %v414, 1.0
    %v416 = vmul.f32 %v415, %v410
    %v417 = vand.u32 2147483647, %v410
    %vm418 = vcmp.lt.f32.partialorder %v417, 0.0004427343
    %v419 = vsel %vm418, %v416, %v413
    %v420 = vadd.f32 %v406, %v419
    %v421 = vsub.f32 0.6931472, %v396
    %v422 = vsub.f32 %v421, %v420
    %v423 = vmul.f32 %v422, 2.0
    %v424 = vsub.f32 %v404, %v423
    %v425 = vsel %vm399, %v424, 0.0
    %v426 = vrot.slane %v425, 4
    %v427 = vadd.f32 %v425, %v426
    %v428 = vrot.slane %v427, 2
    %v429 = vadd.f32 %v427, %v428
    %v430 = vrot.slane %v429, 1
    %v431 = vadd.f32 %v429, %v430
    %vm432 = vcmask 57344
    %433 = vst.msk [vmem:[#allocation4] sm:$0x1] %vm432, %v431
    // Predicated region
    $region34: #{tpu_custom_call.1} parent=1 // pred_check
      _
    $region35: #{tpu_custom_call.1} parent=1 // pred_check_branch
      %435 = sbr.rel (0) target = $region37
    $region36: #{tpu_custom_call.1} parent=1 // pred_region
      %s437 = ssub.s32 128, 128
      %438 = vsyncadd [#allocation3], %s437
      %s440 = sshll.u32 [#allocation2], 4
      %s441 = int_to_ptr.vmem [resolvable:$true] %s440
      %443 = dma.vmem_to_hbm [thread:$0]  %s441, 128, %s8, [#allocation3]
    $region37: #{tpu_custom_call.1} parent=1 // pred_fallthru
      _
    // Predicated region
    $region38: #{tpu_custom_call.1} parent=1 // pred_check
      _
    $region39: #{tpu_custom_call.1} parent=1 // pred_check_branch
      %445 = sbr.rel (0) target = $region41
    $region40: #{tpu_custom_call.1} parent=1 // pred_region
      %s447 = ssub.s32 16, 16
      %448 = vsyncadd [#allocation5], %s447
      %s450 = sshll.u32 [#allocation4], 4
      %s451 = int_to_ptr.vmem [resolvable:$true] %s450
      %453 = dma.vmem_to_hbm [thread:$0]  %s451, 16, %s9, [#allocation5]
    $region41: #{tpu_custom_call.1} parent=1 // pred_fallthru
      _
    // Predicated region
    $region42: #{tpu_custom_call.1} parent=1 // pred_check
      _
    $region43: #{tpu_custom_call.1} parent=1 // pred_check_branch
      %455 = sbr.rel (0) target = $region45
    $region44: #{tpu_custom_call.1} parent=1 // pred_region
      %456 = dma.done [#allocation3], 128
    $region45: #{tpu_custom_call.1} parent=1 // pred_fallthru
      _
    // Predicated region
    $region46: #{tpu_custom_call.1} parent=1 // pred_check
      _
    $region47: #{tpu_custom_call.1} parent=1 // pred_check_branch
      %458 = sbr.rel (0) target = $region49
    $region48: #{tpu_custom_call.1} parent=1 // pred_region
      %459 = dma.done [#allocation5], 16
    $region49: #{tpu_custom_call.1} parent=1 // pred_fallthru
      _
    %460 = vsyncpa [#allocation3], 1
    %461 = vsyncpa [#allocation5], 1

</llo_original>
